<compile_context>
chip_gen: v7x
topology: tpu7x:2x2x1
jax: 0.10.0
libtpu: 0.0.40
codegen_flags: <defaults>
</compile_context>

<pallas_src>
import functools

import jax
import jax.numpy as jnp
from jax import lax
from jax.experimental import pallas as pl
from jax.experimental.pallas import tpu as pltpu

IGNORE_INDEX = 255
EPS = 1e-6
LANES = 128


def _round_up(x, m):
    return ((x + m - 1) // m) * m


def _combined_loss_kernel(pred_ref, tgt_ref,
                          psum_ref, tsum_ref, inter_ref, ce_ref, cnt_ref,
                          *, hw, n_classes, tile):
    """One (batch n, pixel-tile i) grid step.

    pred_ref : (C, TILE)  logits (any float dtype; upcast to f32 here)
    tgt_ref  : (1, TILE)  int32 labels (255 = ignore)
    psum_ref : (C, 128)   per-lane running sum of softmax prob       (dice denom)
    tsum_ref : (C, 128)   per-lane running sum of one-hot target     (dice denom)
    inter_ref: (C, 128)   per-lane running sum of softmax * one-hot  (dice numer)
    ce_ref   : (1, 128)   per-lane running sum of per-pixel CE
    cnt_ref  : (1, 128)   per-lane running count of valid pixels
    """
    @pl.when(pl.program_id(1) == 0)
    def _():
        psum_ref[...] = jnp.zeros_like(psum_ref)
        tsum_ref[...] = jnp.zeros_like(tsum_ref)
        inter_ref[...] = jnp.zeros_like(inter_ref)
        ce_ref[...] = jnp.zeros_like(ce_ref)
        cnt_ref[...] = jnp.zeros_like(cnt_ref)

    x = pred_ref[...].astype(jnp.float32)                   # (C, T)
    t = tgt_ref[...]                                        # (1, T) i32

    # Lanes past the end of the image row (ragged last tile) hold junk -> mask them.
    lane = lax.broadcasted_iota(jnp.int32, (1, tile), 1)    # (1, T)
    in_bounds = (pl.program_id(1) * tile + lane) < hw       # (1, T) bool

    # numerically stable softmax / log-sum-exp over the class (sublane) axis
    m = jnp.max(x, axis=0, keepdims=True)                   # (1, T)
    e = jnp.exp(x - m)                                      # (C, T)
    s = jnp.sum(e, axis=0, keepdims=True)                   # (1, T)
    inv_s = pl.reciprocal(s, approx=False)                  # exact: keeps 1e-5 tol
    softmax = e * inv_s                                     # (C, T)
    lse = m + jnp.log(s)                                    # (1, T)

    cls = lax.broadcasted_iota(jnp.int32, (n_classes, tile), 0)
    onehot = jnp.logical_and(cls == t, in_bounds)           # (C, T) bool
    valid = jnp.logical_and(t != IGNORE_INDEX, in_bounds)   # (1, T) bool

    # cross entropy: -log_softmax(x)[target] = lse - x[target]
    picked = jnp.sum(jnp.where(onehot, x, 0.0), axis=0, keepdims=True)   # (1, T)
    ce_pix = jnp.where(valid, lse - picked, 0.0)                         # (1, T)
    valid_f = jnp.where(valid, 1.0, 0.0)                                 # (1, T)

    # dice sums: softmax over ALL real pixels (ignored pixels included, as in the
    # PyTorch reference); one-hot is zero for ignore_index automatically.
    sm_pix = jnp.where(in_bounds, softmax, 0.0)              # (C, T)
    onehot_f = jnp.where(onehot, 1.0, 0.0)                   # (C, T)
    inter_pix = jnp.where(onehot, softmax, 0.0)              # (C, T)

    # Fold the tile down to 128 lanes with pure VPU adds of vreg-aligned chunks.
    nchunks = tile // LANES

    def lane_fold(v):
        acc = v[:, 0:LANES]
        for j in range(1, nchunks):
            acc = acc + v[:, j * LANES:(j + 1) * LANES]
        return acc

    psum_ref[...] += lane_fold(sm_pix)
    tsum_ref[...] += lane_fold(onehot_f)
    inter_ref[...] += lane_fold(inter_pix)
    ce_ref[...] += lane_fold(ce_pix)
    cnt_ref[...] += lane_fold(valid_f)


def combined_loss(pred, target, *, tile=2048):
    """pred: (N, C, H, W) float logits (f32 or bf16); target: (N, H, W) int labels."""
    N, C, H, W = pred.shape
    HW = H * W

    # Free, contiguous reshapes -- no HBM transpose / pad pass before the kernel.
    pred3 = pred.reshape(N, C, HW)
    tgt3 = target.reshape(N, 1, HW).astype(jnp.int32)

    # Lane tile: multiple of 128, no wider than the (rounded-up) image row.
    tile = _round_up(max(LANES, min(tile, _round_up(HW, LANES))), LANES)
    n_tiles = pl.cdiv(HW, tile)

    kernel = functools.partial(_combined_loss_kernel, hw=HW, n_classes=C, tile=tile)

    acc_c = pl.BlockSpec((None, C, LANES), lambda n, i: (n, 0, 0))
    acc_1 = pl.BlockSpec((None, 1, LANES), lambda n, i: (n, 0, 0))

    psum, tsum, inter, ce_sum, cnt = pl.pallas_call(
        kernel,
        out_shape=(
            jax.ShapeDtypeStruct((N, C, LANES), jnp.float32),
            jax.ShapeDtypeStruct((N, C, LANES), jnp.float32),
            jax.ShapeDtypeStruct((N, C, LANES), jnp.float32),
            jax.ShapeDtypeStruct((N, 1, LANES), jnp.float32),
            jax.ShapeDtypeStruct((N, 1, LANES), jnp.float32),
        ),
        grid_spec=pltpu.PrefetchScalarGridSpec(
            num_scalar_prefetch=0,
            grid=(N, n_tiles),
            in_specs=[
                pl.BlockSpec((None, C, tile), lambda n, i: (n, 0, i)),
                pl.BlockSpec((None, 1, tile), lambda n, i: (n, 0, i)),
            ],
            out_specs=[acc_c, acc_c, acc_c, acc_1, acc_1],
        ),
        compiler_params=pltpu.CompilerParams(
            dimension_semantics=("parallel", "arbitrary"),
            vmem_limit_bytes=48 * 1024 * 1024),
    )(pred3, tgt3)

    # Final scalar combination (tiny glue, matches the PyTorch forward exactly).
    ce = jnp.sum(ce_sum) / jnp.sum(cnt)
    inter_c = jnp.sum(inter, axis=(0, 2))
    psum_c = jnp.sum(psum, axis=(0, 2))
    tsum_c = jnp.sum(tsum, axis=(0, 2))
    dice_coef = (2.0 * inter_c + EPS) / (psum_c + tsum_c + EPS)
    dice_loss = jnp.mean(1.0 - dice_coef)
    return ce + dice_loss


def reference_loss(pred, target):
    """Pure-JAX reference matching torch CombinedLoss semantics."""
    N, C, H, W = pred.shape
    logits = jnp.transpose(pred, (0, 2, 3, 1)).reshape(-1, C).astype(jnp.float32)
    tgt = target.reshape(-1)
    lse = jax.scipy.special.logsumexp(logits, axis=1)
    valid = tgt != IGNORE_INDEX
    tgt_safe = jnp.where(valid, tgt, 0)
    picked = jnp.take_along_axis(logits, tgt_safe[:, None], axis=1)[:, 0]
    ce = jnp.sum(jnp.where(valid, lse - picked, 0.0)) / jnp.sum(valid)
    sm = jax.nn.softmax(logits, axis=1)
    dice_loss = 0.0
    for i in range(C):
        p_i = sm[:, i]
        t_i = (tgt == i).astype(jnp.float32)
        inter = jnp.sum(p_i * t_i)
        coef = (2.0 * inter + EPS) / (jnp.sum(p_i) + jnp.sum(t_i) + EPS)
        dice_loss += 1.0 - coef
    dice_loss /= C
    return ce + dice_loss


if __name__ == "__main__":
    key = jax.random.PRNGKey(0)
    k1, k2, k3 = jax.random.split(key, 3)
    N, C, H, W = 2, 4, 16, 16

    pred = jax.random.normal(k1, (N, C, H, W), dtype=jnp.float32)
    target = jax.random.randint(k2, (N, H, W), 0, C, dtype=jnp.int32)
    # exercise ignore_index=255 on ~10% of pixels
    ignore_mask = jax.random.uniform(k3, (N, H, W)) < 0.1
    target = jnp.where(ignore_mask, IGNORE_INDEX, target)

    loss = combined_loss(pred, target)
    jax.block_until_ready(loss)

    ref = reference_loss(pred, target)
    assert jnp.allclose(loss, ref, rtol=1e-5, atol=1e-5), (loss, ref)

    print("KERNEL_OK")
</pallas_src>

<mosaic_0001>
module attributes {stable_mosaic.version = 11 : i64} {
  func.func @_combined_loss_kernel(%arg0: i32, %arg1: i32, %arg2: memref<1x4x256xf32, #tpu.memory_space<vmem>>, %arg3: memref<1x1x256xi32, #tpu.memory_space<vmem>>, %arg4: memref<1x4x128xf32, #tpu.memory_space<vmem>>, %arg5: memref<1x4x128xf32, #tpu.memory_space<vmem>>, %arg6: memref<1x4x128xf32, #tpu.memory_space<vmem>>, %arg7: memref<1x1x128xf32, #tpu.memory_space<vmem>>, %arg8: memref<1x1x128xf32, #tpu.memory_space<vmem>>) attributes {dimension_semantics = [#tpu.dimension_semantics<parallel>, #tpu.dimension_semantics<arbitrary>], iteration_bounds = array<i64: 2, 1>, scalar_prefetch = 0 : i64, scratch_operands = 0 : i64, tpu.core_type = #tpu.core_type<tc>, window_params = [{transform_indices = @transform_0, window_bounds = array<i64: 1, 4, 256>}, {transform_indices = @transform_1, window_bounds = array<i64: 1, 1, 256>}, {transform_indices = @transform_2, window_bounds = array<i64: 1, 4, 128>}, {transform_indices = @transform_3, window_bounds = array<i64: 1, 4, 128>}, {transform_indices = @transform_4, window_bounds = array<i64: 1, 4, 128>}, {transform_indices = @transform_5, window_bounds = array<i64: 1, 1, 128>}, {transform_indices = @transform_6, window_bounds = array<i64: 1, 1, 128>}]} {
    %c0_i32 = arith.constant 0 : i32
    %0 = arith.cmpi eq, %arg1, %c0_i32 : i32
    %1 = arith.extui %0 : i1 to i32
    %c0_i32_0 = arith.constant 0 : i32
    %2 = arith.cmpi ne, %1, %c0_i32_0 : i32
    scf.if %2 {
      %cst_47 = arith.constant 0.000000e+00 : f32
      %97 = vector.broadcast %cst_47 : f32 to vector<4x128xf32>
      %c0_48 = arith.constant 0 : index
      %c0_49 = arith.constant 0 : index
      %c0_50 = arith.constant 0 : index
      %98 = vector.load %arg4[%c0_48, %c0_49, %c0_50] : memref<1x4x128xf32, #tpu.memory_space<vmem>>, vector<1x4x128xf32>
      %99 = vector.shape_cast %98 : vector<1x4x128xf32> to vector<4x128xf32>
      %100 = vector.shape_cast %97 : vector<4x128xf32> to vector<1x4x128xf32>
      tpu.vector_store %arg4[%c0_48, %c0_49, %c0_50], %100 {strides = array<i32>} : memref<1x4x128xf32, #tpu.memory_space<vmem>>, vector<1x4x128xf32>,
      %cst_51 = arith.constant 0.000000e+00 : f32
      %101 = vector.broadcast %cst_51 : f32 to vector<4x128xf32>
      %c0_52 = arith.constant 0 : index
      %c0_53 = arith.constant 0 : index
      %c0_54 = arith.constant 0 : index
      %102 = vector.load %arg5[%c0_52, %c0_53, %c0_54] : memref<1x4x128xf32, #tpu.memory_space<vmem>>, vector<1x4x128xf32>
      %103 = vector.shape_cast %102 : vector<1x4x128xf32> to vector<4x128xf32>
      %104 = vector.shape_cast %101 : vector<4x128xf32> to vector<1x4x128xf32>
      tpu.vector_store %arg5[%c0_52, %c0_53, %c0_54], %104 {strides = array<i32>} : memref<1x4x128xf32, #tpu.memory_space<vmem>>, vector<1x4x128xf32>,
      %cst_55 = arith.constant 0.000000e+00 : f32
      %105 = vector.broadcast %cst_55 : f32 to vector<4x128xf32>
      %c0_56 = arith.constant 0 : index
      %c0_57 = arith.constant 0 : index
      %c0_58 = arith.constant 0 : index
      %106 = vector.load %arg6[%c0_56, %c0_57, %c0_58] : memref<1x4x128xf32, #tpu.memory_space<vmem>>, vector<1x4x128xf32>
      %107 = vector.shape_cast %106 : vector<1x4x128xf32> to vector<4x128xf32>
      %108 = vector.shape_cast %105 : vector<4x128xf32> to vector<1x4x128xf32>
      tpu.vector_store %arg6[%c0_56, %c0_57, %c0_58], %108 {strides = array<i32>} : memref<1x4x128xf32, #tpu.memory_space<vmem>>, vector<1x4x128xf32>,
      %cst_59 = arith.constant 0.000000e+00 : f32
      %109 = vector.broadcast %cst_59 : f32 to vector<1x128xf32>
      %c0_60 = arith.constant 0 : index
      %c0_61 = arith.constant 0 : index
      %c0_62 = arith.constant 0 : index
      %110 = vector.load %arg7[%c0_60, %c0_61, %c0_62] : memref<1x1x128xf32, #tpu.memory_space<vmem>>, vector<1x1x128xf32>
      %111 = vector.shape_cast %110 : vector<1x1x128xf32> to vector<1x128xf32>
      %112 = vector.shape_cast %109 : vector<1x128xf32> to vector<1x1x128xf32>
      tpu.vector_store %arg7[%c0_60, %c0_61, %c0_62], %112 {strides = array<i32>} : memref<1x1x128xf32, #tpu.memory_space<vmem>>, vector<1x1x128xf32>,
      %cst_63 = arith.constant 0.000000e+00 : f32
      %113 = vector.broadcast %cst_63 : f32 to vector<1x128xf32>
      %c0_64 = arith.constant 0 : index
      %c0_65 = arith.constant 0 : index
      %c0_66 = arith.constant 0 : index
      %114 = vector.load %arg8[%c0_64, %c0_65, %c0_66] : memref<1x1x128xf32, #tpu.memory_space<vmem>>, vector<1x1x128xf32>
      %115 = vector.shape_cast %114 : vector<1x1x128xf32> to vector<1x128xf32>
      %116 = vector.shape_cast %113 : vector<1x128xf32> to vector<1x1x128xf32>
      tpu.vector_store %arg8[%c0_64, %c0_65, %c0_66], %116 {strides = array<i32>} : memref<1x1x128xf32, #tpu.memory_space<vmem>>, vector<1x1x128xf32>,
    } else {
    }
    %c0 = arith.constant 0 : index
    %c0_1 = arith.constant 0 : index
    %c0_2 = arith.constant 0 : index
    %3 = vector.load %arg2[%c0, %c0_1, %c0_2] : memref<1x4x256xf32, #tpu.memory_space<vmem>>, vector<1x4x256xf32>
    %4 = vector.shape_cast %3 : vector<1x4x256xf32> to vector<4x256xf32>
    %c0_3 = arith.constant 0 : index
    %c0_4 = arith.constant 0 : index
    %c0_5 = arith.constant 0 : index
    %5 = vector.load %arg3[%c0_3, %c0_4, %c0_5] : memref<1x1x256xi32, #tpu.memory_space<vmem>>, vector<1x1x256xi32>
    %6 = vector.shape_cast %5 : vector<1x1x256xi32> to vector<1x256xi32>
    %7 = tpu.iota {dimensions = array<i32: 1>} : vector<1x256xi32>
    %c256_i32 = arith.constant 256 : i32
    %8 = arith.muli %arg1, %c256_i32 : i32
    %9 = vector.broadcast %8 : i32 to vector<1x256xi32>
    %10 = arith.addi %9, %7 : vector<1x256xi32>
    %c256_i32_6 = arith.constant 256 : i32
    %11 = vector.broadcast %c256_i32_6 : i32 to vector<1x256xi32>
    %12 = arith.cmpi slt, %10, %11 : vector<1x256xi32>
    %cst = arith.constant dense<0xFF800000> : vector<256xf32>
    %13 = vector.multi_reduction <maximumf>, %4, %cst [0] : vector<4x256xf32> to vector<256xf32>
    %14 = vector.shape_cast %13 : vector<256xf32> to vector<1x256xf32>
    %15 = vector.broadcast %14 : vector<1x256xf32> to vector<4x256xf32>
    %16 = arith.subf %4, %15 : vector<4x256xf32>
    %17 = math.exp %16 : vector<4x256xf32>
    %cst_7 = arith.constant dense<0.000000e+00> : vector<256xf32>
    %18 = vector.multi_reduction <add>, %17, %cst_7 [0] : vector<4x256xf32> to vector<256xf32>
    %19 = vector.shape_cast %18 : vector<256xf32> to vector<1x256xf32>
    %20 = tpu.reciprocal %19 : vector<1x256xf32> -> vector<1x256xf32>
    %21 = vector.broadcast %20 : vector<1x256xf32> to vector<4x256xf32>
    %22 = arith.mulf %17, %21 : vector<4x256xf32>
    %23 = math.log %19 : vector<1x256xf32>
    %24 = arith.addf %14, %23 : vector<1x256xf32>
    %25 = tpu.iota {dimensions = array<i32: 0>} : vector<4x256xi32>
    %26 = vector.broadcast %6 : vector<1x256xi32> to vector<4x256xi32>
    %27 = arith.cmpi eq, %25, %26 : vector<4x256xi32>
    %28 = vector.broadcast %12 : vector<1x256xi1> to vector<4x256xi1>
    %29 = arith.andi %27, %28 : vector<4x256xi1>
    %c255_i32 = arith.constant 255 : i32
    %30 = vector.broadcast %c255_i32 : i32 to vector<1x256xi32>
    %31 = arith.cmpi ne, %6, %30 : vector<1x256xi32>
    %32 = arith.andi %31, %12 : vector<1x256xi1>
    %cst_8 = arith.constant 0.000000e+00 : f32
    %33 = vector.broadcast %cst_8 : f32 to vector<4x256xf32>
    %34 = arith.select %29, %4, %33 : vector<4x256xi1>, vector<4x256xf32>
    %cst_9 = arith.constant dense<0.000000e+00> : vector<256xf32>
    %35 = vector.multi_reduction <add>, %34, %cst_9 [0] : vector<4x256xf32> to vector<256xf32>
    %36 = vector.shape_cast %35 : vector<256xf32> to vector<1x256xf32>
    %37 = arith.subf %24, %36 : vector<1x256xf32>
    %cst_10 = arith.constant 0.000000e+00 : f32
    %38 = vector.broadcast %cst_10 : f32 to vector<1x256xf32>
    %39 = arith.select %32, %37, %38 : vector<1x256xi1>, vector<1x256xf32>
    %cst_11 = arith.constant 1.000000e+00 : f32
    %cst_12 = arith.constant 0.000000e+00 : f32
    %40 = vector.broadcast %cst_11 : f32 to vector<1x256xf32>
    %41 = vector.broadcast %cst_12 : f32 to vector<1x256xf32>
    %42 = arith.select %32, %40, %41 : vector<1x256xi1>, vector<1x256xf32>
    %cst_13 = arith.constant 0.000000e+00 : f32
    %43 = vector.shape_cast %12 : vector<1x256xi1> to vector<1x256xi1>
    %44 = vector.broadcast %43 : vector<1x256xi1> to vector<4x256xi1>
    %45 = vector.broadcast %cst_13 : f32 to vector<4x256xf32>
    %46 = arith.select %44, %22, %45 : vector<4x256xi1>, vector<4x256xf32>
    %cst_14 = arith.constant 1.000000e+00 : f32
    %cst_15 = arith.constant 0.000000e+00 : f32
    %47 = vector.broadcast %cst_14 : f32 to vector<4x256xf32>
    %48 = vector.broadcast %cst_15 : f32 to vector<4x256xf32>
    %49 = arith.select %29, %47, %48 : vector<4x256xi1>, vector<4x256xf32>
    %cst_16 = arith.constant 0.000000e+00 : f32
    %50 = vector.broadcast %cst_16 : f32 to vector<4x256xf32>
    %51 = arith.select %29, %22, %50 : vector<4x256xi1>, vector<4x256xf32>
    %c0_17 = arith.constant 0 : index
    %c0_18 = arith.constant 0 : index
    %c0_19 = arith.constant 0 : index
    %52 = vector.load %arg4[%c0_17, %c0_18, %c0_19] : memref<1x4x128xf32, #tpu.memory_space<vmem>>, vector<1x4x128xf32>
    %53 = vector.shape_cast %52 : vector<1x4x128xf32> to vector<4x128xf32>
    %54 = vector.extract_strided_slice %46 {offsets = [0, 0], sizes = [4, 128], strides = [1, 1]} : vector<4x256xf32> to vector<4x128xf32>
    %55 = vector.extract_strided_slice %46 {offsets = [0, 128], sizes = [4, 128], strides = [1, 1]} : vector<4x256xf32> to vector<4x128xf32>
    %56 = arith.addf %54, %55 : vector<4x128xf32>
    %57 = arith.addf %53, %56 : vector<4x128xf32>
    %c0_20 = arith.constant 0 : index
    %c0_21 = arith.constant 0 : index
    %c0_22 = arith.constant 0 : index
    %58 = vector.load %arg4[%c0_20, %c0_21, %c0_22] : memref<1x4x128xf32, #tpu.memory_space<vmem>>, vector<1x4x128xf32>
    %59 = vector.shape_cast %58 : vector<1x4x128xf32> to vector<4x128xf32>
    %60 = vector.shape_cast %57 : vector<4x128xf32> to vector<1x4x128xf32>
    tpu.vector_store %arg4[%c0_20, %c0_21, %c0_22], %60 {strides = array<i32>} : memref<1x4x128xf32, #tpu.memory_space<vmem>>, vector<1x4x128xf32>,
    %c0_23 = arith.constant 0 : index
    %c0_24 = arith.constant 0 : index
    %c0_25 = arith.constant 0 : index
    %61 = vector.load %arg5[%c0_23, %c0_24, %c0_25] : memref<1x4x128xf32, #tpu.memory_space<vmem>>, vector<1x4x128xf32>
    %62 = vector.shape_cast %61 : vector<1x4x128xf32> to vector<4x128xf32>
    %63 = vector.extract_strided_slice %49 {offsets = [0, 0], sizes = [4, 128], strides = [1, 1]} : vector<4x256xf32> to vector<4x128xf32>
    %64 = vector.extract_strided_slice %49 {offsets = [0, 128], sizes = [4, 128], strides = [1, 1]} : vector<4x256xf32> to vector<4x128xf32>
    %65 = arith.addf %63, %64 : vector<4x128xf32>
    %66 = arith.addf %62, %65 : vector<4x128xf32>
    %c0_26 = arith.constant 0 : index
    %c0_27 = arith.constant 0 : index
    %c0_28 = arith.constant 0 : index
    %67 = vector.load %arg5[%c0_26, %c0_27, %c0_28] : memref<1x4x128xf32, #tpu.memory_space<vmem>>, vector<1x4x128xf32>
    %68 = vector.shape_cast %67 : vector<1x4x128xf32> to vector<4x128xf32>
    %69 = vector.shape_cast %66 : vector<4x128xf32> to vector<1x4x128xf32>
    tpu.vector_store %arg5[%c0_26, %c0_27, %c0_28], %69 {strides = array<i32>} : memref<1x4x128xf32, #tpu.memory_space<vmem>>, vector<1x4x128xf32>,
    %c0_29 = arith.constant 0 : index
    %c0_30 = arith.constant 0 : index
    %c0_31 = arith.constant 0 : index
    %70 = vector.load %arg6[%c0_29, %c0_30, %c0_31] : memref<1x4x128xf32, #tpu.memory_space<vmem>>, vector<1x4x128xf32>
    %71 = vector.shape_cast %70 : vector<1x4x128xf32> to vector<4x128xf32>
    %72 = vector.extract_strided_slice %51 {offsets = [0, 0], sizes = [4, 128], strides = [1, 1]} : vector<4x256xf32> to vector<4x128xf32>
    %73 = vector.extract_strided_slice %51 {offsets = [0, 128], sizes = [4, 128], strides = [1, 1]} : vector<4x256xf32> to vector<4x128xf32>
    %74 = arith.addf %72, %73 : vector<4x128xf32>
    %75 = arith.addf %71, %74 : vector<4x128xf32>
    %c0_32 = arith.constant 0 : index
    %c0_33 = arith.constant 0 : index
    %c0_34 = arith.constant 0 : index
    %76 = vector.load %arg6[%c0_32, %c0_33, %c0_34] : memref<1x4x128xf32, #tpu.memory_space<vmem>>, vector<1x4x128xf32>
    %77 = vector.shape_cast %76 : vector<1x4x128xf32> to vector<4x128xf32>
    %78 = vector.shape_cast %75 : vector<4x128xf32> to vector<1x4x128xf32>
    tpu.vector_store %arg6[%c0_32, %c0_33, %c0_34], %78 {strides = array<i32>} : memref<1x4x128xf32, #tpu.memory_space<vmem>>, vector<1x4x128xf32>,
    %c0_35 = arith.constant 0 : index
    %c0_36 = arith.constant 0 : index
    %c0_37 = arith.constant 0 : index
    %79 = vector.load %arg7[%c0_35, %c0_36, %c0_37] : memref<1x1x128xf32, #tpu.memory_space<vmem>>, vector<1x1x128xf32>
    %80 = vector.shape_cast %79 : vector<1x1x128xf32> to vector<1x128xf32>
    %81 = vector.extract_strided_slice %39 {offsets = [0, 0], sizes = [1, 128], strides = [1, 1]} : vector<1x256xf32> to vector<1x128xf32>
    %82 = vector.extract_strided_slice %39 {offsets = [0, 128], sizes = [1, 128], strides = [1, 1]} : vector<1x256xf32> to vector<1x128xf32>
    %83 = arith.addf %81, %82 : vector<1x128xf32>
    %84 = arith.addf %80, %83 : vector<1x128xf32>
    %c0_38 = arith.constant 0 : index
    %c0_39 = arith.constant 0 : index
    %c0_40 = arith.constant 0 : index
    %85 = vector.load %arg7[%c0_38, %c0_39, %c0_40] : memref<1x1x128xf32, #tpu.memory_space<vmem>>, vector<1x1x128xf32>
    %86 = vector.shape_cast %85 : vector<1x1x128xf32> to vector<1x128xf32>
    %87 = vector.shape_cast %84 : vector<1x128xf32> to vector<1x1x128xf32>
    tpu.vector_store %arg7[%c0_38, %c0_39, %c0_40], %87 {strides = array<i32>} : memref<1x1x128xf32, #tpu.memory_space<vmem>>, vector<1x1x128xf32>,
    %c0_41 = arith.constant 0 : index
    %c0_42 = arith.constant 0 : index
    %c0_43 = arith.constant 0 : index
    %88 = vector.load %arg8[%c0_41, %c0_42, %c0_43] : memref<1x1x128xf32, #tpu.memory_space<vmem>>, vector<1x1x128xf32>
    %89 = vector.shape_cast %88 : vector<1x1x128xf32> to vector<1x128xf32>
    %90 = vector.extract_strided_slice %42 {offsets = [0, 0], sizes = [1, 128], strides = [1, 1]} : vector<1x256xf32> to vector<1x128xf32>
    %91 = vector.extract_strided_slice %42 {offsets = [0, 128], sizes = [1, 128], strides = [1, 1]} : vector<1x256xf32> to vector<1x128xf32>
    %92 = arith.addf %90, %91 : vector<1x128xf32>
    %93 = arith.addf %89, %92 : vector<1x128xf32>
    %c0_44 = arith.constant 0 : index
    %c0_45 = arith.constant 0 : index
    %c0_46 = arith.constant 0 : index
    %94 = vector.load %arg8[%c0_44, %c0_45, %c0_46] : memref<1x1x128xf32, #tpu.memory_space<vmem>>, vector<1x1x128xf32>
    %95 = vector.shape_cast %94 : vector<1x1x128xf32> to vector<1x128xf32>
    %96 = vector.shape_cast %93 : vector<1x128xf32> to vector<1x1x128xf32>
    tpu.vector_store %arg8[%c0_44, %c0_45, %c0_46], %96 {strides = array<i32>} : memref<1x1x128xf32, #tpu.memory_space<vmem>>, vector<1x1x128xf32>,
    return
  }
  func.func @transform_0(%arg0: i32, %arg1: i32) -> (i32, i32, i32) {
    %c0_i32 = arith.constant 0 : i32
    %c0_i32_0 = arith.constant 0 : i32
    return %arg0, %c0_i32, %arg1 : i32, i32, i32
  }
  func.func @transform_1(%arg0: i32, %arg1: i32) -> (i32, i32, i32) {
    %c0_i32 = arith.constant 0 : i32
    %c0_i32_0 = arith.constant 0 : i32
    return %arg0, %c0_i32, %arg1 : i32, i32, i32
  }
  func.func @transform_2(%arg0: i32, %arg1: i32) -> (i32, i32, i32) {
    %c0_i32 = arith.constant 0 : i32
    %c0_i32_0 = arith.constant 0 : i32
    %c0_i32_1 = arith.constant 0 : i32
    return %arg0, %c0_i32, %c0_i32_0 : i32, i32, i32
  }
  func.func @transform_3(%arg0: i32, %arg1: i32) -> (i32, i32, i32) {
    %c0_i32 = arith.constant 0 : i32
    %c0_i32_0 = arith.constant 0 : i32
    %c0_i32_1 = arith.constant 0 : i32
    return %arg0, %c0_i32, %c0_i32_0 : i32, i32, i32
  }
  func.func @transform_4(%arg0: i32, %arg1: i32) -> (i32, i32, i32) {
    %c0_i32 = arith.constant 0 : i32
    %c0_i32_0 = arith.constant 0 : i32
    %c0_i32_1 = arith.constant 0 : i32
    return %arg0, %c0_i32, %c0_i32_0 : i32, i32, i32
  }
  func.func @transform_5(%arg0: i32, %arg1: i32) -> (i32, i32, i32) {
    %c0_i32 = arith.constant 0 : i32
    %c0_i32_0 = arith.constant 0 : i32
    %c0_i32_1 = arith.constant 0 : i32
    return %arg0, %c0_i32, %c0_i32_0 : i32, i32, i32
  }
  func.func @transform_6(%arg0: i32, %arg1: i32) -> (i32, i32, i32) {
    %c0_i32 = arith.constant 0 : i32
    %c0_i32_0 = arith.constant 0 : i32
    %c0_i32_1 = arith.constant 0 : i32
    return %arg0, %c0_i32, %c0_i32_0 : i32, i32, i32
  }
}

</mosaic_0001>

<llo_original>
// kernel: tpu_custom_call.1
$region0: #{tpu_custom_call.1}
  #allocation0 [shape = 'u32[]', space=smem, size = 0x4, offset = 0x4, fixed_abs, tag = 'smem constant byte address 0x4 - core index']
  #allocation1 [shape = 'u32[144,128]{1,0:T(1,128)}', space=vmem, size = 0x12000, scoped, tag = 'internal scratch']
  %s0 = inlined_call_operand.hbm [shape: f32[2,4,256], index: 0, kind: input, shape index: {}]
  %s1 = inlined_call_operand.hbm [shape: s32[2,1,256], index: 1, kind: input, shape index: {}]
  %s2 = inlined_call_operand.hbm [shape: f32[2,4,128], index: 2, kind: output, shape index: {0}]
  %s3 = inlined_call_operand.hbm [shape: f32[2,4,128], index: 3, kind: output, shape index: {1}]
  %s4 = inlined_call_operand.hbm [shape: f32[2,4,128], index: 4, kind: output, shape index: {2}]
  %s5 = inlined_call_operand.hbm [shape: f32[2,1,128], index: 5, kind: output, shape index: {3}]
  %s6 = inlined_call_operand.hbm [shape: f32[2,1,128], index: 6, kind: output, shape index: {4}]
  %7 = xla_tuple %s2, %s3, %s4, %s5, %s6
  %s8 = sld [smem:[#allocation0]]
  $region85: #{tpu_custom_call.1} parent=0
    _
  %s10 = ssub.s32 1, %s8
  %s11 = scalar_select 0, %s10, %s8
  $region1: #{tpu_custom_call.1} parent=0
    #allocation2 [shape = 'u8[8192]{0}', space=vmem, size = 0x2000, scoped, tag = 'input window, operand 0']
    #allocation3 [shape = 's32[2]{0}', space=sflag, size = 0x8, scoped, tag = 'scoped memory for tpu_custom_call.1']
    #allocation4 [shape = 's32[2]{0}', space=sflag, size = 0x8, scoped, tag = 'scoped memory for tpu_custom_call.1']
    #allocation5 [shape = 'u8[2048]{0}', space=vmem, size = 0x800, scoped, tag = 'input window, operand 1']
    #allocation6 [shape = 's32[2]{0}', space=sflag, size = 0x8, scoped, tag = 'scoped memory for tpu_custom_call.1']
    #allocation7 [shape = 'u8[4096]{0}', space=vmem, size = 0x1000, scoped, tag = 'output window, operand 0']
    #allocation8 [shape = 'u8[4096]{0}', space=vmem, size = 0x1000, scoped, tag = 'output window, operand 1']
    #allocation9 [shape = 's32[2]{0}', space=sflag, size = 0x8, scoped, tag = 'scoped memory for tpu_custom_call.1']
    #allocation10 [shape = 'u8[4096]{0}', space=vmem, size = 0x1000, scoped, tag = 'output window, operand 2']
    #allocation11 [shape = 'u8[1024]{0}', space=vmem, size = 0x400, scoped, tag = 'output window, operand 3']
    #allocation12 [shape = 's32[2]{0}', space=sflag, size = 0x8, scoped, tag = 'scoped memory for tpu_custom_call.1']
    #allocation13 [shape = 'u8[1024]{0}', space=vmem, size = 0x400, scoped, tag = 'output window, operand 4']
    %12 = vsyncpa [#allocation3], 0
    %s13 = scalar_lea.sflag [#allocation3], 1
    %14 = vsyncpa %s13, 0
    %15 = vsyncpa [#allocation6], 0
    %s16 = scalar_lea.sflag [#allocation6], 1
    %17 = vsyncpa %s16, 0
    %18 = vsyncpa [#allocation4], 0
    %s19 = scalar_lea.sflag [#allocation4], 1
    %20 = vsyncpa %s19, 0
    %21 = vsyncpa [#allocation9], 0
    %s22 = scalar_lea.sflag [#allocation9], 1
    %23 = vsyncpa %s22, 0
    %24 = vsyncpa [#allocation12], 0
    %s25 = scalar_lea.sflag [#allocation12], 1
    %26 = vsyncpa %s25, 0
    loop: start=0, step=1, limit=4
    $region2: #{tpu_custom_call.1} parent=1 // loop_pre_header
      _
    $region3: #{tpu_custom_call.1} parent=1 // loop_header
      %s28 = sphi 0, %s32
      %p29 = scmp.ge.s32.totalorder %s28, 4
      %s35 = sphi 0, %s47
      %s36 = sphi 0, %s43
      %s37 = sphi 0, %s35
      %s38 = sphi 0, %s36
      %s39 = sphi 0, %s37
      %s40 = sphi 0, %s38
      %s52 = sphi 0, %s54
      %s55 = sphi 0, %s52
      %s56 = sphi 0, %s55
      %s72 = sphi 0, %s56
      %s80 = sphi 0, %s82
      %s83 = sphi 0, %s80
      %s84 = sphi 0, %s83
      %s100 = sphi 0, %s84
      %s106 = sphi 0, %s108
      %s109 = sphi 0, %s106
      %s110 = sphi 0, %s109
      %s126 = sphi 0, %s110
      %s132 = sphi 0, %s134
      %s135 = sphi 0, %s132
      %s136 = sphi 0, %s135
      %s152 = sphi 0, %s136
      %s158 = sphi 0, %s160
      %s161 = sphi 0, %s158
      %s162 = sphi 0, %s161
      %s178 = sphi 0, %s162
      %s184 = sphi 0, %s186
      %s187 = sphi 0, %s184
      %s188 = sphi 0, %s187
      %s204 = sphi 0, %s188
      %s210 = sphi 0, %s212
      %s213 = sphi 0, %s210
      %s214 = sphi 0, %s213
      %s230 = sphi 0, %s214
    $region4: #{tpu_custom_call.1} parent=1 // loop_header_branch
      %31 = sbr.rel (%p29) target = $region8
    $region5: #{tpu_custom_call.1} parent=1 // loop_body
      %s33 = ssub.s32 %s28, 1
      %s34 = ssub.s32 %s28, 2
      %s41 = sadd.s32 1, %s36
      %p42 = scmp.ge.s32.totalorder %s41, 1
      %s43 = scalar_select %p42, 0, %s41
      %s44 = sadd.s32 1, %s35
      %s45 = scalar_select %p42, %s44, %s35
      %p46 = scmp.ge.s32.totalorder %s45, 2
      %s47 = scalar_select %p46, 0, %s45
      %s48 = ssub.s32 %s35, %s47
      %s49 = ssub.s32 %s36, %s43
      %s50 = sor.u32 %s48, %s49
      %p51 = scmp.eq.s32.totalorder %s50, 0
      %s53 = sadd.s32 %s52, 1
      %s54 = scalar_select %p51, %s52, %s53
      %p57 = pneg %p51
      %p58 = scmp.eq.s32.totalorder %s28, 1
      %p59 = por %p57, %p58
      %p60 = scmp.ne.s32.totalorder %s52, %s55
      %p61 = scmp.eq.s32.totalorder %s28, 0
      %p62 = por %p60, %p61
      %p63 = scmp.ne.s32.totalorder %s52, %s55
      %p64 = scmp.eq.s32.totalorder %s33, 1
      %p65 = por %p63, %p64
      %p66 = scmp.ne.s32.totalorder %s55, %s56
      %p67 = scmp.eq.s32.totalorder %s33, 0
      %p68 = por %p66, %p67
      %p69 = scmp.ne.s32.totalorder %s55, %s56
      %p70 = scmp.eq.s32.totalorder %s34, 1
      %p71 = por %p69, %p70
      %p73 = scmp.ne.s32.totalorder %s56, %s72
      %p74 = scmp.eq.s32.totalorder %s34, 0
      %p75 = por %p73, %p74
      %s76 = ssub.s32 %s35, %s47
      %s77 = ssub.s32 %s36, %s43
      %s78 = sor.u32 %s76, %s77
      %p79 = scmp.eq.s32.totalorder %s78, 0
      %s81 = sadd.s32 %s80, 1
      %s82 = scalar_select %p79, %s80, %s81
      %p85 = pneg %p79
      %p86 = scmp.eq.s32.totalorder %s28, 1
      %p87 = por %p85, %p86
      %p88 = scmp.ne.s32.totalorder %s80, %s83
      %p89 = scmp.eq.s32.totalorder %s28, 0
      %p90 = por %p88, %p89
      %p91 = scmp.ne.s32.totalorder %s80, %s83
      %p92 = scmp.eq.s32.totalorder %s33, 1
      %p93 = por %p91, %p92
      %p94 = scmp.ne.s32.totalorder %s83, %s84
      %p95 = scmp.eq.s32.totalorder %s33, 0
      %p96 = por %p94, %p95
      %p97 = scmp.ne.s32.totalorder %s83, %s84
      %p98 = scmp.eq.s32.totalorder %s34, 1
      %p99 = por %p97, %p98
      %p101 = scmp.ne.s32.totalorder %s84, %s100
      %p102 = scmp.eq.s32.totalorder %s34, 0
      %p103 = por %p101, %p102
      %s104 = ssub.s32 %s35, %s47
      %p105 = scmp.eq.s32.totalorder %s104, 0
      %s107 = sadd.s32 %s106, 1
      %s108 = scalar_select %p105, %s106, %s107
      %p111 = pneg %p105
      %p112 = scmp.eq.s32.totalorder %s28, 1
      %p113 = por %p111, %p112
      %p114 = scmp.ne.s32.totalorder %s106, %s109
      %p115 = scmp.eq.s32.totalorder %s28, 0
      %p116 = por %p114, %p115
      %p117 = scmp.ne.s32.totalorder %s106, %s109
      %p118 = scmp.eq.s32.totalorder %s33, 1
      %p119 = por %p117, %p118
      %p120 = scmp.ne.s32.totalorder %s109, %s110
      %p121 = scmp.eq.s32.totalorder %s33, 0
      %p122 = por %p120, %p121
      %p123 = scmp.ne.s32.totalorder %s109, %s110
      %p124 = scmp.eq.s32.totalorder %s34, 1
      %p125 = por %p123, %p124
      %p127 = scmp.ne.s32.totalorder %s110, %s126
      %p128 = scmp.eq.s32.totalorder %s34, 0
      %p129 = por %p127, %p128
      %s130 = ssub.s32 %s35, %s47
      %p131 = scmp.eq.s32.totalorder %s130, 0
      %s133 = sadd.s32 %s132, 1
      %s134 = scalar_select %p131, %s132, %s133
      %p137 = pneg %p131
      %p138 = scmp.eq.s32.totalorder %s28, 1
      %p139 = por %p137, %p138
      %p140 = scmp.ne.s32.totalorder %s132, %s135
      %p141 = scmp.eq.s32.totalorder %s28, 0
      %p142 = por %p140, %p141
      %p143 = scmp.ne.s32.totalorder %s132, %s135
      %p144 = scmp.eq.s32.totalorder %s33, 1
      %p145 = por %p143, %p144
      %p146 = scmp.ne.s32.totalorder %s135, %s136
      %p147 = scmp.eq.s32.totalorder %s33, 0
      %p148 = por %p146, %p147
      %p149 = scmp.ne.s32.totalorder %s135, %s136
      %p150 = scmp.eq.s32.totalorder %s34, 1
      %p151 = por %p149, %p150
      %p153 = scmp.ne.s32.totalorder %s136, %s152
      %p154 = scmp.eq.s32.totalorder %s34, 0
      %p155 = por %p153, %p154
      %s156 = ssub.s32 %s35, %s47
      %p157 = scmp.eq.s32.totalorder %s156, 0
      %s159 = sadd.s32 %s158, 1
      %s160 = scalar_select %p157, %s158, %s159
      %p163 = pneg %p157
      %p164 = scmp.eq.s32.totalorder %s28, 1
      %p165 = por %p163, %p164
      %p166 = scmp.ne.s32.totalorder %s158, %s161
      %p167 = scmp.eq.s32.totalorder %s28, 0
      %p168 = por %p166, %p167
      %p169 = scmp.ne.s32.totalorder %s158, %s161
      %p170 = scmp.eq.s32.totalorder %s33, 1
      %p171 = por %p169, %p170
      %p172 = scmp.ne.s32.totalorder %s161, %s162
      %p173 = scmp.eq.s32.totalorder %s33, 0
      %p174 = por %p172, %p173
      %p175 = scmp.ne.s32.totalorder %s161, %s162
      %p176 = scmp.eq.s32.totalorder %s34, 1
      %p177 = por %p175, %p176
      %p179 = scmp.ne.s32.totalorder %s162, %s178
      %p180 = scmp.eq.s32.totalorder %s34, 0
      %p181 = por %p179, %p180
      %s182 = ssub.s32 %s35, %s47
      %p183 = scmp.eq.s32.totalorder %s182, 0
      %s185 = sadd.s32 %s184, 1
      %s186 = scalar_select %p183, %s184, %s185
      %p189 = pneg %p183
      %p190 = scmp.eq.s32.totalorder %s28, 1
      %p191 = por %p189, %p190
      %p192 = scmp.ne.s32.totalorder %s184, %s187
      %p193 = scmp.eq.s32.totalorder %s28, 0
      %p194 = por %p192, %p193
      %p195 = scmp.ne.s32.totalorder %s184, %s187
      %p196 = scmp.eq.s32.totalorder %s33, 1
      %p197 = por %p195, %p196
      %p198 = scmp.ne.s32.totalorder %s187, %s188
      %p199 = scmp.eq.s32.totalorder %s33, 0
      %p200 = por %p198, %p199
      %p201 = scmp.ne.s32.totalorder %s187, %s188
      %p202 = scmp.eq.s32.totalorder %s34, 1
      %p203 = por %p201, %p202
      %p205 = scmp.ne.s32.totalorder %s188, %s204
      %p206 = scmp.eq.s32.totalorder %s34, 0
      %p207 = por %p205, %p206
      %s208 = ssub.s32 %s35, %s47
      %p209 = scmp.eq.s32.totalorder %s208, 0
      %s211 = sadd.s32 %s210, 1
      %s212 = scalar_select %p209, %s210, %s211
      %p215 = pneg %p209
      %p216 = scmp.eq.s32.totalorder %s28, 1
      %p217 = por %p215, %p216
      %p218 = scmp.ne.s32.totalorder %s210, %s213
      %p219 = scmp.eq.s32.totalorder %s28, 0
      %p220 = por %p218, %p219
      %p221 = scmp.ne.s32.totalorder %s210, %s213
      %p222 = scmp.eq.s32.totalorder %s33, 1
      %p223 = por %p221, %p222
      %p224 = scmp.ne.s32.totalorder %s213, %s214
      %p225 = scmp.eq.s32.totalorder %s33, 0
      %p226 = por %p224, %p225
      %p227 = scmp.ne.s32.totalorder %s213, %s214
      %p228 = scmp.eq.s32.totalorder %s34, 1
      %p229 = por %p227, %p228
      %p231 = scmp.ne.s32.totalorder %s214, %s230
      %p232 = scmp.eq.s32.totalorder %s34, 0
      %p233 = por %p231, %p232
      %p234 = scmp.le.s32.totalorder 1, %s28
      %p235 = scmp.lt.s32.totalorder %s28, 3
      %p236 = pnand %p234, %p235
      %p237 = pneg %p236
      // Predicated region
      $region9: #{tpu_custom_call.1} parent=5 // pred_check
        _
      $region10: #{tpu_custom_call.1} parent=5 // pred_check_branch
        %239 = sbr.rel (%p236) target = $region12
      $region11: #{tpu_custom_call.1} parent=5 // pred_region
        %s240 = ssub.s32 %s28, 1
      $region12: #{tpu_custom_call.1} parent=5 // pred_fallthru
        _
      %p241 = scmp.lt.s32.totalorder %s28, 2
      // Predicated region
      $region13: #{tpu_custom_call.1} parent=5 // pred_check
        %p242 = pneg %p241
      $region14: #{tpu_custom_call.1} parent=5 // pred_check_branch
        %244 = sbr.rel (%p242) target = $region16
      $region15: #{tpu_custom_call.1} parent=5 // pred_region
        // Predicated region
        $region17: #{tpu_custom_call.1} parent=15 // pred_check
          %p245 = pneg %p62
        $region18: #{tpu_custom_call.1} parent=15 // pred_check_branch
          %247 = sbr.rel (%p245) target = $region20
        $region19: #{tpu_custom_call.1} parent=15 // pred_region
          %s248 = sand.u32 %s52, 1
          %s249 = scalar_lea.sflag [#allocation3], %s248
          %s250 = sand.u32 %s52, 1
          %s251 = smul.addr %s250, 8
          %s252 = scalar_lea.vmem [#allocation2], %s251
          %s253 = smul.u32 2, %s36
          %s255 = ssub.s32 128, 128
          %256 = vsyncadd %s249, %s255
          %s257 = smul.addr %s35, 2
          %s258 = sadd.s32 %s253, %s257
          %s259 = smul.addr %s258, 64
          %s260 = scalar_lea.hbm %s0, %s259
          %s262 = sshll.u32 %s252, 4
          %s263 = int_to_ptr.vmem [resolvable:$true] %s262
          %265 = dma.hbm_to_vmem [thread:$0]  %s260, 128, %s263, %s249
        $region20: #{tpu_custom_call.1} parent=15 // pred_fallthru
          _
        // Predicated region
        $region21: #{tpu_custom_call.1} parent=15 // pred_check
          %p266 = pneg %p90
        $region22: #{tpu_custom_call.1} parent=15 // pred_check_branch
          %268 = sbr.rel (%p266) target = $region24
        $region23: #{tpu_custom_call.1} parent=15 // pred_region
          %s269 = sand.u32 %s80, 1
          %s270 = scalar_lea.sflag [#allocation6], %s269
          %s271 = sand.u32 %s80, 1
          %s272 = smul.addr %s271, 2
          %s273 = scalar_lea.vmem [#allocation5], %s272
          %s274 = smul.u32 2, %s36
          %s276 = ssub.s32 32, 32
          %277 = vsyncadd %s270, %s276
          %s278 = smul.addr %s35, 2
          %s279 = sadd.s32 %s274, %s278
          %s280 = smul.addr %s279, 16
          %s281 = scalar_lea.hbm %s1, %s280
          %s283 = sshll.u32 %s273, 4
          %s284 = int_to_ptr.vmem [resolvable:$true] %s283
          %286 = dma.hbm_to_vmem [thread:$0]  %s281, 32, %s284, %s270
        $region24: #{tpu_custom_call.1} parent=15 // pred_fallthru
          _
      $region16: #{tpu_custom_call.1} parent=5 // pred_fallthru
        _
      %p287 = scmp.le.s32.totalorder 1, %s28
      %p288 = scmp.lt.s32.totalorder %s28, 3
      %p289 = pnand %p287, %p288
      %p290 = pneg %p289
      // Predicated region
      $region25: #{tpu_custom_call.1} parent=5 // pred_check
        _
      $region26: #{tpu_custom_call.1} parent=5 // pred_check_branch
        %292 = sbr.rel (%p289) target = $region28
      $region27: #{tpu_custom_call.1} parent=5 // pred_region
        %s293 = ssub.s32 %s28, 1
        %s294 = sand.u32 %s55, 1
        %s295 = scalar_lea.sflag [#allocation3], %s294
        %s296 = sand.u32 %s55, 1
        %s297 = smul.addr %s296, 8
        %s298 = scalar_lea.vmem [#allocation2], %s297
        // Predicated region
        $region29: #{tpu_custom_call.1} parent=27 // pred_check
          %p299 = pneg %p68
        $region30: #{tpu_custom_call.1} parent=27 // pred_check_branch
          %301 = sbr.rel (%p299) target = $region32
        $region31: #{tpu_custom_call.1} parent=27 // pred_region
          %302 = dma.done %s295, 128
        $region32: #{tpu_custom_call.1} parent=27 // pred_fallthru
          _
        %s303 = sand.u32 %s83, 1
        %s304 = scalar_lea.sflag [#allocation6], %s303
        %s305 = sand.u32 %s83, 1
        %s306 = smul.addr %s305, 2
        %s307 = scalar_lea.vmem [#allocation5], %s306
        // Predicated region
        $region33: #{tpu_custom_call.1} parent=27 // pred_check
          %p308 = pneg %p96
        $region34: #{tpu_custom_call.1} parent=27 // pred_check_branch
          %310 = sbr.rel (%p308) target = $region36
        $region35: #{tpu_custom_call.1} parent=27 // pred_region
          %311 = dma.done %s304, 32
        $region36: #{tpu_custom_call.1} parent=27 // pred_fallthru
          _
        %s312 = sand.u32 %s55, 1
        %s313 = scalar_lea.sflag [#allocation3], %s312
        %s314 = sand.u32 %s55, 1
        %s315 = smul.addr %s314, 8
        %s316 = scalar_lea.vmem [#allocation2], %s315
        %p317 = pneg %p68
        %p318 = pneg %p65
        %s319 = sand.u32 %s83, 1
        %s320 = scalar_lea.sflag [#allocation6], %s319
        %s321 = sand.u32 %s83, 1
        %s322 = smul.addr %s321, 2
        %s323 = scalar_lea.vmem [#allocation5], %s322
        %p324 = pneg %p96
        %p325 = pneg %p93
        %p326 = pneg %p122
        %p327 = pneg %p119
        %s328 = sand.u32 %s109, 1
        %s329 = scalar_lea.sflag [#allocation4], %s328
        %s330 = sand.u32 %s109, 1
        %s331 = smul.addr %s330, 4
        %s332 = scalar_lea.vmem [#allocation7], %s331
        %p333 = pneg %p148
        %p334 = pneg %p145
        %s335 = sand.u32 %s33, 1
        %s336 = scalar_lea.sflag [#allocation9], %s335
        %s337 = sand.u32 %s135, 1
        %s338 = smul.addr %s337, 4
        %s339 = scalar_lea.vmem [#allocation8], %s338
        %p340 = pneg %p174
        %p341 = pneg %p171
        %s342 = sand.u32 %s33, 1
        %s343 = scalar_lea.sflag [#allocation9], %s342
        %s344 = sand.u32 %s161, 1
        %s345 = smul.addr %s344, 4
        %s346 = scalar_lea.vmem [#allocation10], %s345
        %p347 = pneg %p200
        %p348 = pneg %p197
        %s349 = sand.u32 %s33, 1
        %s350 = scalar_lea.sflag [#allocation12], %s349
        %s351 = sand.u32 %s187, 1
        %s352 = scalar_lea.vmem [#allocation11], %s351
        %p353 = pneg %p226
        %p354 = pneg %p223
        %s355 = sand.u32 %s33, 1
        %s356 = scalar_lea.sflag [#allocation12], %s355
        %s357 = sand.u32 %s213, 1
        %s358 = scalar_lea.vmem [#allocation13], %s357
        %s359 = smul.u32 2, %s38
        %s360 = smul.u32 2, %s38
        %p361 = scmp.eq.s32.totalorder %s38, 0
        // Predicated region
        $region37: #{tpu_custom_call.1} parent=27 // pred_check
          %p362 = pneg %p361
        $region38: #{tpu_custom_call.1} parent=27 // pred_check_branch
          %364 = sbr.rel (%p362) target = $region40
        $region39: #{tpu_custom_call.1} parent=27 // pred_region
          %365 = vst [vmem:[%s332] sm:$0xf] 0.0
          %366 = vst [vmem:[%s339] sm:$0xf] 0.0
          %367 = vst [vmem:[%s346] sm:$0xf] 0.0
          %368 = vst [vmem:[%s352] sm:$0x1] 0.0
          %369 = vst [vmem:[%s358] sm:$0x1] 0.0
        $region40: #{tpu_custom_call.1} parent=27 // pred_fallthru
          _
        %v370 = vld [vmem:[%s298] sm:$0xff]
        %v371 = vld [vmem:[%s307] sm:$0x3]
        %v372 = vlaneseq
        %v373 = vand.u32 %v372, 127
        %v374 = vadd.s32 %v373, 128
        %s375 = smul.u32 %s38, 256
        %v376 = vstv %s375
        %v377 = vadd.s32 %v376, %v373
        %v378 = vadd.s32 %v376, %v374
        %vm379 = vcmp.lt.s32.totalorder %v377, 256
        %vm380 = vcmp.lt.s32.totalorder %v378, 256
        %v382 = vcombine.high %v370, %v370
        %vm384 = vcmask 1043456
        %v385 = vsel %vm384, %v370, -inf
        %v386 = vrot.slane %v385, 4
        %v387 = vmax.f32 %v385, %v386
        %v388 = vrot.slane %v387, 2
        %v389 = vmax.f32 %v387, %v388
        %v390 = vrot.slane %v389, 1
        %v391 = vmax.f32 %v389, %v390
        %v392 = vsel %vm384, %v382, -inf
        %v393 = vrot.slane %v392, 4
        %v394 = vmax.f32 %v392, %v393
        %v395 = vrot.slane %v394, 2
        %v396 = vmax.f32 %v394, %v395
        %v397 = vrot.slane %v396, 1
        %v398 = vmax.f32 %v396, %v397
        %v401 = vcombine.low %v391, %v398
        %v403 = vsub.f32 %v370, %v401
        %v404 = vmul.f32 %v403, 1.442695
        %v405 = vpow.pop %v404
        %v407 = vcombine.high %v405, %v405
        %v409 = vsel %vm384, %v405, 0.0
        %v410 = vrot.slane %v409, 4
        %v411 = vadd.f32 %v409, %v410
        %v412 = vrot.slane %v411, 2
        %v413 = vadd.f32 %v411, %v412
        %v414 = vrot.slane %v413, 1
        %v415 = vadd.f32 %v413, %v414
        %v416 = vsel %vm384, %v407, 0.0
        %v417 = vrot.slane %v416, 4
        %v418 = vadd.f32 %v416, %v417
        %v419 = vrot.slane %v418, 2
        %v420 = vadd.f32 %v418, %v419
        %v421 = vrot.slane %v420, 1
        %v422 = vadd.f32 %v420, %v421
        %v423 = vrcp.pop %v415
        %v424 = vrcp.pop %v422
        %v427 = vcombine.low %v423, %v424
        %v429 = vmul.f32 %v405, %v427
        %v430 = vlog2.pop %v415
        %v431 = vmul.f32 %v430, 0.6931472
        %v432 = vlog2.pop %v422
        %v433 = vmul.f32 %v432, 0.6931472
        %v434 = vadd.f32 %v391, %v431
        %v435 = vadd.f32 %v398, %v433
        %v436 = vlaneseq
        %v437 = vshrl.u32 %v436, 7
        %v438 = vlaneseq
        %v439 = vshrl.u32 %v438, 7
        %v440 = vsub.s32 0, %v439
        %v441 = vrot.slane %v371, %v440
        %v442 = vlaneseq
        %v443 = vshrl.u32 %v442, 7
        %v444 = vsub.s32 1, %v443
        %v445 = vrot.slane %v371, %v444
        %vm446 = vcmp.eq.s32.totalorder %v437, %v441
        %vm447 = vcmp.eq.s32.totalorder %v437, %v445
        %v448 = vsel %vm379, 1, 0
        %v449 = vsel %vm380, 1, 0
        %vm450 = vcmp.eq.s32.totalorder %v448, 1
        %vm451 = vcmp.eq.s32.totalorder %v449, 1
        %vm452 = vmand %vm446, %vm450
        %vm453 = vmand %vm447, %vm451
        %vm454 = vcmp.ne.s32.totalorder %v371, 255
        %v455 = vcombine.low %v448, %v449
        %v457 = vunpack.c.l.s4 1966171168
        %v458 = vunpack.c.0.s8 %v457
        %v459 = vlaneseq
        %v460 = vshrl.u32 %v459, 7
        %v461 = vsub.s32 %v458, %v460
        %v462 = vrot.slane %v455, %v461
        %v464 = vunpack.c.l.s4 1966171168
        %v465 = vunpack.c.0.s8 %v464
        %v466 = vlaneseq
        %v467 = vshrl.u32 %v466, 7
        %v468 = vsub.s32 %v465, %v467
        %v469 = vrot.slane %v462, %v468
        %vm470 = vcmp.ne.s32.totalorder %v469, 0
        %vm471 = vmand %vm454, %vm470
        %v472 = vsel %vm452, %v370, 0.0
        %v473 = vsel %vm453, %v382, 0.0
        %v474 = vsel %vm384, %v472, 0.0
        %v475 = vrot.slane %v474, 4
        %v476 = vadd.f32 %v474, %v475
        %v477 = vrot.slane %v476, 2
        %v478 = vadd.f32 %v476, %v477
        %v479 = vrot.slane %v478, 1
        %v480 = vadd.f32 %v478, %v479
        %v481 = vsel %vm384, %v473, 0.0
        %v482 = vrot.slane %v481, 4
        %v483 = vadd.f32 %v481, %v482
        %v484 = vrot.slane %v483, 2
        %v485 = vadd.f32 %v483, %v484
        %v486 = vrot.slane %v485, 1
        %v487 = vadd.f32 %v485, %v486
        %v488 = vsub.f32 %v434, %v480
        %v489 = vsub.f32 %v435, %v487
        %v492 = vcombine.low %v488, %v489
        %v494 = vunpack.c.l.s4 1966171168
        %v495 = vunpack.c.0.s8 %v494
        %v496 = vlaneseq
        %v497 = vshrl.u32 %v496, 7
        %v498 = vsub.s32 %v495, %v497
        %v499 = vrot.slane %v492, %v498
        %v501 = vunpack.c.l.s4 1966171168
        %v502 = vunpack.c.0.s8 %v501
        %v503 = vlaneseq
        %v504 = vshrl.u32 %v503, 7
        %v505 = vsub.s32 %v502, %v504
        %v506 = vrot.slane %v499, %v505
        %v508 = vsel %vm471, %v506, 0.0
        %v509 = vsel %vm471, 1.0, 0.0
        %v511 = vcombine.high %v429, %v429
        %v513 = vsel %vm450, %v429, 0.0
        %v514 = vsel %vm451, %v511, 0.0
        %v515 = vsel %vm452, 1.0, 0.0
        %v516 = vsel %vm453, 1.0, 0.0
        %v517 = vsel %vm452, %v429, 0.0
        %v518 = vsel %vm453, %v511, 0.0
        %v519 = vld [vmem:[%s332] sm:$0xf]
        %v520 = vadd.f32 %v513, %v514
        %v521 = vadd.f32 %v519, %v520
        %522 = vst [vmem:[%s332] sm:$0xf] %v521
        %v523 = vld [vmem:[%s339] sm:$0xf]
        %v524 = vadd.f32 %v515, %v516
        %v525 = vadd.f32 %v523, %v524
        %526 = vst [vmem:[%s339] sm:$0xf] %v525
        %v527 = vld [vmem:[%s346] sm:$0xf]
        %v528 = vadd.f32 %v517, %v518
        %v529 = vadd.f32 %v527, %v528
        %530 = vst [vmem:[%s346] sm:$0xf] %v529
        %v531 = vld [vmem:[%s352] sm:$0x1]
        %v533 = vrot.slane %v508, 1
        %v535 = vadd.f32 %v508, %v533
        %v536 = vadd.f32 %v531, %v535
        %537 = vst [vmem:[%s352] sm:$0x1] %v536
        %v538 = vld [vmem:[%s358] sm:$0x1]
        %v540 = vrot.slane %v509, 1
        %v542 = vadd.f32 %v509, %v540
        %v543 = vadd.f32 %v538, %v542
        %544 = vst [vmem:[%s358] sm:$0x1] %v543
        %s545 = sand.u32 %s109, 1
        %s546 = scalar_lea.sflag [#allocation4], %s545
        %s547 = sand.u32 %s109, 1
        %s548 = smul.addr %s547, 4
        %s549 = scalar_lea.vmem [#allocation7], %s548
        %s550 = sand.u32 %s33, 1
        %s551 = scalar_lea.sflag [#allocation9], %s550
        %s552 = sand.u32 %s135, 1
        %s553 = smul.addr %s552, 4
        %s554 = scalar_lea.vmem [#allocation8], %s553
        %s555 = sand.u32 %s33, 1
        %s556 = scalar_lea.sflag [#allocation9], %s555
        %s557 = sand.u32 %s161, 1
        %s558 = smul.addr %s557, 4
        %s559 = scalar_lea.vmem [#allocation10], %s558
        %s560 = sand.u32 %s33, 1
        %s561 = scalar_lea.sflag [#allocation12], %s560
        %s562 = sand.u32 %s187, 1
        %s563 = scalar_lea.vmem [#allocation11], %s562
        %s564 = sand.u32 %s33, 1
        %s565 = scalar_lea.sflag [#allocation12], %s564
        %s566 = sand.u32 %s213, 1
        %s567 = scalar_lea.vmem [#allocation13], %s566
        // Predicated region
        $region41: #{tpu_custom_call.1} parent=27 // pred_check
          %p568 = pneg %p119
        $region42: #{tpu_custom_call.1} parent=27 // pred_check_branch
          %570 = sbr.rel (%p568) target = $region44
        $region43: #{tpu_custom_call.1} parent=27 // pred_region
          %s572 = ssub.s32 64, 64
          %573 = vsyncadd %s546, %s572
          %s574 = smul.addr %s37, 64
          %s575 = scalar_lea.hbm %s2, %s574
          %s577 = sshll.u32 %s549, 4
          %s578 = int_to_ptr.vmem [resolvable:$true] %s577
          %580 = dma.vmem_to_hbm [thread:$0]  %s578, 64, %s575, %s546
        $region44: #{tpu_custom_call.1} parent=27 // pred_fallthru
          _
        // Predicated region
        $region45: #{tpu_custom_call.1} parent=27 // pred_check
          %p581 = pneg %p145
        $region46: #{tpu_custom_call.1} parent=27 // pred_check_branch
          %583 = sbr.rel (%p581) target = $region48
        $region47: #{tpu_custom_call.1} parent=27 // pred_region
          %s585 = ssub.s32 64, 64
          %586 = vsyncadd %s551, %s585
          %s587 = smul.addr %s37, 64
          %s588 = scalar_lea.hbm %s3, %s587
          %s590 = sshll.u32 %s554, 4
          %s591 = int_to_ptr.vmem [resolvable:$true] %s590
          %593 = dma.vmem_to_hbm [thread:$0]  %s591, 64, %s588, %s551
        $region48: #{tpu_custom_call.1} parent=27 // pred_fallthru
          _
        // Predicated region
        $region49: #{tpu_custom_call.1} parent=27 // pred_check
          %p594 = pneg %p171
        $region50: #{tpu_custom_call.1} parent=27 // pred_check_branch
          %596 = sbr.rel (%p594) target = $region52
        $region51: #{tpu_custom_call.1} parent=27 // pred_region
          %s598 = ssub.s32 64, 64
          %599 = vsyncadd %s556, %s598
          %s600 = smul.addr %s37, 64
          %s601 = scalar_lea.hbm %s4, %s600
          %s603 = sshll.u32 %s559, 4
          %s604 = int_to_ptr.vmem [resolvable:$true] %s603
          %606 = dma.vmem_to_hbm [thread:$0]  %s604, 64, %s601, %s556
        $region52: #{tpu_custom_call.1} parent=27 // pred_fallthru
          _
        // Predicated region
        $region53: #{tpu_custom_call.1} parent=27 // pred_check
          %p607 = pneg %p197
        $region54: #{tpu_custom_call.1} parent=27 // pred_check_branch
          %609 = sbr.rel (%p607) target = $region56
        $region55: #{tpu_custom_call.1} parent=27 // pred_region
          %s611 = ssub.s32 16, 16
          %612 = vsyncadd %s561, %s611
          %s613 = smul.addr %s37, 16
          %s614 = scalar_lea.hbm %s5, %s613
          %s616 = sshll.u32 %s563, 4
          %s617 = int_to_ptr.vmem [resolvable:$true] %s616
          %619 = dma.vmem_to_hbm [thread:$0]  %s617, 16, %s614, %s561
        $region56: #{tpu_custom_call.1} parent=27 // pred_fallthru
          _
        // Predicated region
        $region57: #{tpu_custom_call.1} parent=27 // pred_check
          %p620 = pneg %p223
        $region58: #{tpu_custom_call.1} parent=27 // pred_check_branch
          %622 = sbr.rel (%p620) target = $region60
        $region59: #{tpu_custom_call.1} parent=27 // pred_region
          %s624 = ssub.s32 16, 16
          %625 = vsyncadd %s565, %s624
          %s626 = smul.addr %s37, 16
          %s627 = scalar_lea.hbm %s6, %s626
          %s629 = sshll.u32 %s567, 4
          %s630 = int_to_ptr.vmem [resolvable:$true] %s629
          %632 = dma.vmem_to_hbm [thread:$0]  %s630, 16, %s627, %s565
        $region60: #{tpu_custom_call.1} parent=27 // pred_fallthru
          _
      $region28: #{tpu_custom_call.1} parent=5 // pred_fallthru
        _
      %p633 = scmp.le.s32.totalorder 2, %s28
      // Predicated region
      $region61: #{tpu_custom_call.1} parent=5 // pred_check
        %p634 = pneg %p633
      $region62: #{tpu_custom_call.1} parent=5 // pred_check_branch
        %636 = sbr.rel (%p634) target = $region64
      $region63: #{tpu_custom_call.1} parent=5 // pred_region
        %s637 = ssub.s32 %s28, 2
        // Predicated region
        $region65: #{tpu_custom_call.1} parent=63 // pred_check
          %p638 = pneg %p125
        $region66: #{tpu_custom_call.1} parent=63 // pred_check_branch
          %640 = sbr.rel (%p638) target = $region68
        $region67: #{tpu_custom_call.1} parent=63 // pred_region
          %s641 = sand.u32 %s110, 1
          %s642 = scalar_lea.sflag [#allocation4], %s641
          %s643 = sand.u32 %s110, 1
          %s644 = smul.addr %s643, 4
          %s645 = scalar_lea.vmem [#allocation7], %s644
          %646 = dma.done %s642, 64
        $region68: #{tpu_custom_call.1} parent=63 // pred_fallthru
          _
        // Predicated region
        $region69: #{tpu_custom_call.1} parent=63 // pred_check
          %p647 = pneg %p151
        $region70: #{tpu_custom_call.1} parent=63 // pred_check_branch
          %649 = sbr.rel (%p647) target = $region72
        $region71: #{tpu_custom_call.1} parent=63 // pred_region
          %s650 = sand.u32 %s34, 1
          %s651 = scalar_lea.sflag [#allocation9], %s650
          %s652 = sand.u32 %s136, 1
          %s653 = smul.addr %s652, 4
          %s654 = scalar_lea.vmem [#allocation8], %s653
          %655 = dma.done %s651, 64
        $region72: #{tpu_custom_call.1} parent=63 // pred_fallthru
          _
        // Predicated region
        $region73: #{tpu_custom_call.1} parent=63 // pred_check
          %p656 = pneg %p177
        $region74: #{tpu_custom_call.1} parent=63 // pred_check_branch
          %658 = sbr.rel (%p656) target = $region76
        $region75: #{tpu_custom_call.1} parent=63 // pred_region
          %s659 = sand.u32 %s34, 1
          %s660 = scalar_lea.sflag [#allocation9], %s659
          %s661 = sand.u32 %s162, 1
          %s662 = smul.addr %s661, 4
          %s663 = scalar_lea.vmem [#allocation10], %s662
          %664 = dma.done %s660, 64
        $region76: #{tpu_custom_call.1} parent=63 // pred_fallthru
          _
        // Predicated region
        $region77: #{tpu_custom_call.1} parent=63 // pred_check
          %p665 = pneg %p203
        $region78: #{tpu_custom_call.1} parent=63 // pred_check_branch
          %667 = sbr.rel (%p665) target = $region80
        $region79: #{tpu_custom_call.1} parent=63 // pred_region
          %s668 = sand.u32 %s34, 1
          %s669 = scalar_lea.sflag [#allocation12], %s668
          %s670 = sand.u32 %s188, 1
          %s671 = scalar_lea.vmem [#allocation11], %s670
          %672 = dma.done %s669, 16
        $region80: #{tpu_custom_call.1} parent=63 // pred_fallthru
          _
        // Predicated region
        $region81: #{tpu_custom_call.1} parent=63 // pred_check
          %p673 = pneg %p229
        $region82: #{tpu_custom_call.1} parent=63 // pred_check_branch
          %675 = sbr.rel (%p673) target = $region84
        $region83: #{tpu_custom_call.1} parent=63 // pred_region
          %s676 = sand.u32 %s34, 1
          %s677 = scalar_lea.sflag [#allocation12], %s676
          %s678 = sand.u32 %s214, 1
          %s679 = scalar_lea.vmem [#allocation13], %s678
          %680 = dma.done %s677, 16
        $region84: #{tpu_custom_call.1} parent=63 // pred_fallthru
          _
      $region64: #{tpu_custom_call.1} parent=5 // pred_fallthru
        _
    $region6: #{tpu_custom_call.1} parent=1 // loop_footer
      %s32 = sadd.s32 1, %s28
    $region7: #{tpu_custom_call.1} parent=1 // loop_footer_branch
      %27 = sbr.rel target = $region3
    $region8: #{tpu_custom_call.1} parent=1 // loop_exit
      _
    %681 = vsyncpa [#allocation3], 1
    %s682 = scalar_lea.sflag [#allocation3], 1
    %683 = vsyncpa %s682, 1
    %684 = vsyncpa [#allocation6], 1
    %s685 = scalar_lea.sflag [#allocation6], 1
    %686 = vsyncpa %s685, 1
    %687 = vsyncpa [#allocation4], 1
    %s688 = scalar_lea.sflag [#allocation4], 1
    %689 = vsyncpa %s688, 1
    %690 = vsyncpa [#allocation9], 1
    %s691 = scalar_lea.sflag [#allocation9], 1
    %692 = vsyncpa %s691, 1
    %693 = vsyncpa [#allocation12], 1
    %s694 = scalar_lea.sflag [#allocation12], 1
    %695 = vsyncpa %s694, 1

</llo_original>
